<compile_context>
chip_gen: v7x
topology: tpu7x:2x2x1
jax: 0.10.0
libtpu: 0.0.40
codegen_flags: <defaults>
</compile_context>

<pallas_src>
import jax
import jax.numpy as jnp
from jax.experimental import pallas as pl
from jax.experimental.pallas import tpu as pltpu


def teprnn2_kernel(xflat_ref, w1r_ref, b1r_ref, wihT_ref, whhT_ref, bias_ref,
                   w2T_ref, b2_ref, out_ref):
    H = whhT_ref.shape[0]
    Bp = out_ref.shape[0]
    T = xflat_ref.shape[0] // Bp
    H3 = 3 * H

    # ---- fc1 + tanh for all (t, b) at once (2D, lane-dense) ----
    fc1 = jnp.tanh(xflat_ref[...] * w1r_ref[...] + b1r_ref[...])        # (T*Bp, 4)

    # ---- input projection into LSTM gates, all timesteps, bias folded in ----
    # Single MXU matmul with K=4; gate columns already ordered [i, f, o, g].
    xproj = (jnp.dot(fc1, wihT_ref[...], preferred_element_type=jnp.float32)
             + bias_ref[...])                                           # (T*Bp, 4H)

    whhT = whhT_ref[...]                                                # (H, 4H)
    h = jnp.zeros((Bp, H), jnp.float32)
    c = jnp.zeros((Bp, H), jnp.float32)

    # ---- LSTM recurrence, fully unrolled; h/c stay in vregs ----
    for t in range(T):
        gates = (xproj[t * Bp:(t + 1) * Bp, :]                          # aligned slice
                 + jnp.dot(h, whhT, preferred_element_type=jnp.float32))  # (Bp, 4H)
        sig = jax.nn.sigmoid(gates[:, 0:H3])       # contiguous [ i | f | o ]
        g_g = jnp.tanh(gates[:, H3:])
        i_g = sig[:, 0:H]
        f_g = sig[:, H:2 * H]
        o_g = sig[:, 2 * H:H3]
        c = f_g * c + i_g * g_g
        h = o_g * jnp.tanh(c)

    # ---- fc2 on the last hidden state (MXU, N = 1) ----
    out_ref[...] = (jnp.dot(h, w2T_ref[...], preferred_element_type=jnp.float32)
                    + b2_ref[0])


def teprnn2_forward(x, params):
    """x: (B, n_waypts) float32 -> (B, 1) float32."""
    w1, b1, wih, whh, bih, bhh, w2, b2 = params
    B, T = x.shape
    H = whh.shape[1]

    # Pad batch to a sublane-tile multiple so per-step slices are 8-aligned.
    Bp = pl.cdiv(B, 8) * 8
    x_pad = jnp.zeros((Bp, T), jnp.float32).at[:B, :].set(x.astype(jnp.float32))
    xflat = x_pad.T.reshape(T * Bp, 1)                 # time-major rows: t*Bp + b

    def permute_gates(w):
        # PyTorch LSTM gate blocks along dim 0: [i, f, g, o] -> reorder [i, f, o, g]
        i, f, g, o = jnp.split(w, 4, axis=0)
        return jnp.concatenate([i, f, o, g], axis=0)

    w1r = w1[:, 0].reshape(1, 4)
    b1r = b1.reshape(1, 4)
    wihT = permute_gates(wih).T                        # (4, 4H)
    whhT = permute_gates(whh).T                        # (H, 4H)
    bias = permute_gates(bih + bhh).reshape(1, 4 * H)  # (1, 4H)
    w2T = w2.reshape(1, H).T                           # (H, 1)
    b2s = b2.reshape(1,)

    vmem = pl.BlockSpec(memory_space=pltpu.MemorySpace.VMEM)
    smem = pl.BlockSpec(memory_space=pltpu.MemorySpace.SMEM)

    # Working set < 1 MiB -> no grid needed; a batch-parallel grid (megacore on
    # v7x) only pays off once B is large enough to amortize ~0.35 us/step.
    out = pl.pallas_call(
        teprnn2_kernel,
        out_shape=jax.ShapeDtypeStruct((Bp, 1), jnp.float32),
        in_specs=[vmem, vmem, vmem, vmem, vmem, vmem, vmem, smem],
        out_specs=vmem,
    )(xflat, w1r, b1r, wihT, whhT, bias, w2T, b2s)
    return out[:B]


def teprnn2_reference(x, params):
    """Pure-JAX reference matching the PyTorch forward exactly (gate order i,f,g,o)."""
    w1, b1, wih, whh, bih, bhh, w2, b2 = params
    B, T = x.shape
    H = whh.shape[1]
    fc1 = jnp.tanh(x[:, :, None] * w1[:, 0][None, None, :] + b1[None, None, :])
    h = jnp.zeros((B, H), jnp.float32)
    c = jnp.zeros((B, H), jnp.float32)
    for t in range(T):
        gates = fc1[:, t, :] @ wih.T + bih + h @ whh.T + bhh
        i_g = jax.nn.sigmoid(gates[:, 0:H])
        f_g = jax.nn.sigmoid(gates[:, H:2 * H])
        g_g = jnp.tanh(gates[:, 2 * H:3 * H])
        o_g = jax.nn.sigmoid(gates[:, 3 * H:4 * H])
        c = f_g * c + i_g * g_g
        h = o_g * jnp.tanh(c)
    return h @ w2.T + b2


if __name__ == "__main__":
    B = 2            # batch
    T = 8            # n_waypts (sequence length)
    H = 64           # hid_dim (module default)

    key = jax.random.PRNGKey(0)
    ks = jax.random.split(key, 9)
    s = 1.0 / (H ** 0.5)

    def u(k, shape, scale):
        return jax.random.uniform(k, shape, jnp.float32, -scale, scale)

    # Deterministic synthetic parameters (PyTorch parameter shape conventions).
    w1 = u(ks[0], (4, 1), 1.0)            # fc1.weight
    b1 = u(ks[1], (4,), 1.0)              # fc1.bias
    wih = u(ks[2], (4 * H, 4), s)         # rnn.weight_ih_l0
    whh = u(ks[3], (4 * H, H), s)         # rnn.weight_hh_l0
    bih = u(ks[4], (4 * H,), s)           # rnn.bias_ih_l0
    bhh = u(ks[5], (4 * H,), s)           # rnn.bias_hh_l0
    w2 = u(ks[6], (1, H), s)              # fc2.weight
    b2 = u(ks[7], (1,), s)                # fc2.bias
    params = (w1, b1, wih, whh, bih, bhh, w2, b2)

    x = jax.random.normal(ks[8], (B, T), jnp.float32)

    out = teprnn2_forward(x, params)
    out = jax.block_until_ready(out)

    ref = teprnn2_reference(x, params)
    assert out.shape == (B, 1)
    assert jnp.allclose(out, ref, atol=1e-5, rtol=1e-5), (out, ref)
    print("KERNEL_OK")
</pallas_src>

<mosaic_0001>
module attributes {stable_mosaic.version = 11 : i64} {
  func.func @teprnn2_kernel(%arg0: memref<64x1xf32, #tpu.memory_space<vmem>>, %arg1: memref<1x4xf32, #tpu.memory_space<vmem>>, %arg2: memref<1x4xf32, #tpu.memory_space<vmem>>, %arg3: memref<4x256xf32, #tpu.memory_space<vmem>>, %arg4: memref<64x256xf32, #tpu.memory_space<vmem>>, %arg5: memref<1x256xf32, #tpu.memory_space<vmem>>, %arg6: memref<64x1xf32, #tpu.memory_space<vmem>>, %arg7: memref<1xf32, #tpu.memory_space<smem>>, %arg8: memref<8x1xf32, #tpu.memory_space<vmem>>) attributes {dimension_semantics = [], scalar_prefetch = 0 : i64, scratch_operands = 0 : i64, tpu.core_type = #tpu.core_type<tc>} {
    %c0 = arith.constant 0 : index
    %c0_0 = arith.constant 0 : index
    %0 = vector.load %arg0[%c0, %c0_0] : memref<64x1xf32, #tpu.memory_space<vmem>>, vector<64x1xf32>
    %c0_1 = arith.constant 0 : index
    %c0_2 = arith.constant 0 : index
    %1 = vector.load %arg1[%c0_1, %c0_2] : memref<1x4xf32, #tpu.memory_space<vmem>>, vector<1x4xf32>
    %2 = vector.broadcast %0 : vector<64x1xf32> to vector<64x4xf32>
    %3 = vector.broadcast %1 : vector<1x4xf32> to vector<64x4xf32>
    %4 = arith.mulf %2, %3 : vector<64x4xf32>
    %c0_3 = arith.constant 0 : index
    %c0_4 = arith.constant 0 : index
    %5 = vector.load %arg2[%c0_3, %c0_4] : memref<1x4xf32, #tpu.memory_space<vmem>>, vector<1x4xf32>
    %6 = vector.broadcast %5 : vector<1x4xf32> to vector<64x4xf32>
    %7 = arith.addf %4, %6 : vector<64x4xf32>
    %8 = math.tanh %7 : vector<64x4xf32>
    %c0_5 = arith.constant 0 : index
    %c0_6 = arith.constant 0 : index
    %9 = vector.load %arg3[%c0_5, %c0_6] : memref<4x256xf32, #tpu.memory_space<vmem>>, vector<4x256xf32>
    %cst = arith.constant dense<0.000000e+00> : vector<64x256xf32>
    %10 = tpu.matmul %8, %9, %cst {dimension_numbers = #tpu.dot_dimension_numbers<[1], [0], [0], [1], [0, 0, 1, 1], [], []>} : vector<64x4xf32>, vector<4x256xf32>, vector<64x256xf32> -> vector<64x256xf32>
    %c0_7 = arith.constant 0 : index
    %c0_8 = arith.constant 0 : index
    %11 = vector.load %arg5[%c0_7, %c0_8] : memref<1x256xf32, #tpu.memory_space<vmem>>, vector<1x256xf32>
    %12 = vector.broadcast %11 : vector<1x256xf32> to vector<64x256xf32>
    %13 = arith.addf %10, %12 : vector<64x256xf32>
    %c0_9 = arith.constant 0 : index
    %c0_10 = arith.constant 0 : index
    %14 = vector.load %arg4[%c0_9, %c0_10] : memref<64x256xf32, #tpu.memory_space<vmem>>, vector<64x256xf32>
    %cst_11 = arith.constant 0.000000e+00 : f32
    %15 = vector.broadcast %cst_11 : f32 to vector<8x64xf32>
    %cst_12 = arith.constant 0.000000e+00 : f32
    %16 = vector.broadcast %cst_12 : f32 to vector<8x64xf32>
    %17 = vector.extract_strided_slice %13 {offsets = [0, 0], sizes = [8, 256], strides = [1, 1]} : vector<64x256xf32> to vector<8x256xf32>
    %cst_13 = arith.constant dense<0.000000e+00> : vector<8x256xf32>
    %18 = tpu.matmul %15, %14, %cst_13 {dimension_numbers = #tpu.dot_dimension_numbers<[1], [0], [0], [1], [0, 0, 1, 1], [], []>} : vector<8x64xf32>, vector<64x256xf32>, vector<8x256xf32> -> vector<8x256xf32>
    %19 = arith.addf %17, %18 : vector<8x256xf32>
    %20 = vector.extract_strided_slice %19 {offsets = [0, 0], sizes = [8, 192], strides = [1, 1]} : vector<8x256xf32> to vector<8x192xf32>
    %21 = arith.negf %20 : vector<8x192xf32>
    %22 = math.exp %21 : vector<8x192xf32>
    %cst_14 = arith.constant 1.000000e+00 : f32
    %23 = vector.broadcast %cst_14 : f32 to vector<8x192xf32>
    %24 = arith.addf %23, %22 : vector<8x192xf32>
    %25 = arith.divf %23, %24 : vector<8x192xf32>
    %26 = vector.extract_strided_slice %19 {offsets = [0, 192], sizes = [8, 64], strides = [1, 1]} : vector<8x256xf32> to vector<8x64xf32>
    %27 = math.tanh %26 : vector<8x64xf32>
    %28 = vector.extract_strided_slice %25 {offsets = [0, 0], sizes = [8, 64], strides = [1, 1]} : vector<8x192xf32> to vector<8x64xf32>
    %29 = vector.extract_strided_slice %25 {offsets = [0, 64], sizes = [8, 64], strides = [1, 1]} : vector<8x192xf32> to vector<8x64xf32>
    %30 = vector.extract_strided_slice %25 {offsets = [0, 128], sizes = [8, 64], strides = [1, 1]} : vector<8x192xf32> to vector<8x64xf32>
    %31 = arith.mulf %29, %16 : vector<8x64xf32>
    %32 = arith.mulf %28, %27 : vector<8x64xf32>
    %33 = arith.addf %31, %32 : vector<8x64xf32>
    %34 = math.tanh %33 : vector<8x64xf32>
    %35 = arith.mulf %30, %34 : vector<8x64xf32>
    %36 = vector.extract_strided_slice %13 {offsets = [8, 0], sizes = [8, 256], strides = [1, 1]} : vector<64x256xf32> to vector<8x256xf32>
    %cst_15 = arith.constant dense<0.000000e+00> : vector<8x256xf32>
    %37 = tpu.matmul %35, %14, %cst_15 {dimension_numbers = #tpu.dot_dimension_numbers<[1], [0], [0], [1], [0, 0, 1, 1], [], []>} : vector<8x64xf32>, vector<64x256xf32>, vector<8x256xf32> -> vector<8x256xf32>
    %38 = arith.addf %36, %37 : vector<8x256xf32>
    %39 = vector.extract_strided_slice %38 {offsets = [0, 0], sizes = [8, 192], strides = [1, 1]} : vector<8x256xf32> to vector<8x192xf32>
    %40 = arith.negf %39 : vector<8x192xf32>
    %41 = math.exp %40 : vector<8x192xf32>
    %cst_16 = arith.constant 1.000000e+00 : f32
    %42 = vector.broadcast %cst_16 : f32 to vector<8x192xf32>
    %43 = arith.addf %42, %41 : vector<8x192xf32>
    %44 = arith.divf %42, %43 : vector<8x192xf32>
    %45 = vector.extract_strided_slice %38 {offsets = [0, 192], sizes = [8, 64], strides = [1, 1]} : vector<8x256xf32> to vector<8x64xf32>
    %46 = math.tanh %45 : vector<8x64xf32>
    %47 = vector.extract_strided_slice %44 {offsets = [0, 0], sizes = [8, 64], strides = [1, 1]} : vector<8x192xf32> to vector<8x64xf32>
    %48 = vector.extract_strided_slice %44 {offsets = [0, 64], sizes = [8, 64], strides = [1, 1]} : vector<8x192xf32> to vector<8x64xf32>
    %49 = vector.extract_strided_slice %44 {offsets = [0, 128], sizes = [8, 64], strides = [1, 1]} : vector<8x192xf32> to vector<8x64xf32>
    %50 = arith.mulf %48, %33 : vector<8x64xf32>
    %51 = arith.mulf %47, %46 : vector<8x64xf32>
    %52 = arith.addf %50, %51 : vector<8x64xf32>
    %53 = math.tanh %52 : vector<8x64xf32>
    %54 = arith.mulf %49, %53 : vector<8x64xf32>
    %55 = vector.extract_strided_slice %13 {offsets = [16, 0], sizes = [8, 256], strides = [1, 1]} : vector<64x256xf32> to vector<8x256xf32>
    %cst_17 = arith.constant dense<0.000000e+00> : vector<8x256xf32>
    %56 = tpu.matmul %54, %14, %cst_17 {dimension_numbers = #tpu.dot_dimension_numbers<[1], [0], [0], [1], [0, 0, 1, 1], [], []>} : vector<8x64xf32>, vector<64x256xf32>, vector<8x256xf32> -> vector<8x256xf32>
    %57 = arith.addf %55, %56 : vector<8x256xf32>
    %58 = vector.extract_strided_slice %57 {offsets = [0, 0], sizes = [8, 192], strides = [1, 1]} : vector<8x256xf32> to vector<8x192xf32>
    %59 = arith.negf %58 : vector<8x192xf32>
    %60 = math.exp %59 : vector<8x192xf32>
    %cst_18 = arith.constant 1.000000e+00 : f32
    %61 = vector.broadcast %cst_18 : f32 to vector<8x192xf32>
    %62 = arith.addf %61, %60 : vector<8x192xf32>
    %63 = arith.divf %61, %62 : vector<8x192xf32>
    %64 = vector.extract_strided_slice %57 {offsets = [0, 192], sizes = [8, 64], strides = [1, 1]} : vector<8x256xf32> to vector<8x64xf32>
    %65 = math.tanh %64 : vector<8x64xf32>
    %66 = vector.extract_strided_slice %63 {offsets = [0, 0], sizes = [8, 64], strides = [1, 1]} : vector<8x192xf32> to vector<8x64xf32>
    %67 = vector.extract_strided_slice %63 {offsets = [0, 64], sizes = [8, 64], strides = [1, 1]} : vector<8x192xf32> to vector<8x64xf32>
    %68 = vector.extract_strided_slice %63 {offsets = [0, 128], sizes = [8, 64], strides = [1, 1]} : vector<8x192xf32> to vector<8x64xf32>
    %69 = arith.mulf %67, %52 : vector<8x64xf32>
    %70 = arith.mulf %66, %65 : vector<8x64xf32>
    %71 = arith.addf %69, %70 : vector<8x64xf32>
    %72 = math.tanh %71 : vector<8x64xf32>
    %73 = arith.mulf %68, %72 : vector<8x64xf32>
    %74 = vector.extract_strided_slice %13 {offsets = [24, 0], sizes = [8, 256], strides = [1, 1]} : vector<64x256xf32> to vector<8x256xf32>
    %cst_19 = arith.constant dense<0.000000e+00> : vector<8x256xf32>
    %75 = tpu.matmul %73, %14, %cst_19 {dimension_numbers = #tpu.dot_dimension_numbers<[1], [0], [0], [1], [0, 0, 1, 1], [], []>} : vector<8x64xf32>, vector<64x256xf32>, vector<8x256xf32> -> vector<8x256xf32>
    %76 = arith.addf %74, %75 : vector<8x256xf32>
    %77 = vector.extract_strided_slice %76 {offsets = [0, 0], sizes = [8, 192], strides = [1, 1]} : vector<8x256xf32> to vector<8x192xf32>
    %78 = arith.negf %77 : vector<8x192xf32>
    %79 = math.exp %78 : vector<8x192xf32>
    %cst_20 = arith.constant 1.000000e+00 : f32
    %80 = vector.broadcast %cst_20 : f32 to vector<8x192xf32>
    %81 = arith.addf %80, %79 : vector<8x192xf32>
    %82 = arith.divf %80, %81 : vector<8x192xf32>
    %83 = vector.extract_strided_slice %76 {offsets = [0, 192], sizes = [8, 64], strides = [1, 1]} : vector<8x256xf32> to vector<8x64xf32>
    %84 = math.tanh %83 : vector<8x64xf32>
    %85 = vector.extract_strided_slice %82 {offsets = [0, 0], sizes = [8, 64], strides = [1, 1]} : vector<8x192xf32> to vector<8x64xf32>
    %86 = vector.extract_strided_slice %82 {offsets = [0, 64], sizes = [8, 64], strides = [1, 1]} : vector<8x192xf32> to vector<8x64xf32>
    %87 = vector.extract_strided_slice %82 {offsets = [0, 128], sizes = [8, 64], strides = [1, 1]} : vector<8x192xf32> to vector<8x64xf32>
    %88 = arith.mulf %86, %71 : vector<8x64xf32>
    %89 = arith.mulf %85, %84 : vector<8x64xf32>
    %90 = arith.addf %88, %89 : vector<8x64xf32>
    %91 = math.tanh %90 : vector<8x64xf32>
    %92 = arith.mulf %87, %91 : vector<8x64xf32>
    %93 = vector.extract_strided_slice %13 {offsets = [32, 0], sizes = [8, 256], strides = [1, 1]} : vector<64x256xf32> to vector<8x256xf32>
    %cst_21 = arith.constant dense<0.000000e+00> : vector<8x256xf32>
    %94 = tpu.matmul %92, %14, %cst_21 {dimension_numbers = #tpu.dot_dimension_numbers<[1], [0], [0], [1], [0, 0, 1, 1], [], []>} : vector<8x64xf32>, vector<64x256xf32>, vector<8x256xf32> -> vector<8x256xf32>
    %95 = arith.addf %93, %94 : vector<8x256xf32>
    %96 = vector.extract_strided_slice %95 {offsets = [0, 0], sizes = [8, 192], strides = [1, 1]} : vector<8x256xf32> to vector<8x192xf32>
    %97 = arith.negf %96 : vector<8x192xf32>
    %98 = math.exp %97 : vector<8x192xf32>
    %cst_22 = arith.constant 1.000000e+00 : f32
    %99 = vector.broadcast %cst_22 : f32 to vector<8x192xf32>
    %100 = arith.addf %99, %98 : vector<8x192xf32>
    %101 = arith.divf %99, %100 : vector<8x192xf32>
    %102 = vector.extract_strided_slice %95 {offsets = [0, 192], sizes = [8, 64], strides = [1, 1]} : vector<8x256xf32> to vector<8x64xf32>
    %103 = math.tanh %102 : vector<8x64xf32>
    %104 = vector.extract_strided_slice %101 {offsets = [0, 0], sizes = [8, 64], strides = [1, 1]} : vector<8x192xf32> to vector<8x64xf32>
    %105 = vector.extract_strided_slice %101 {offsets = [0, 64], sizes = [8, 64], strides = [1, 1]} : vector<8x192xf32> to vector<8x64xf32>
    %106 = vector.extract_strided_slice %101 {offsets = [0, 128], sizes = [8, 64], strides = [1, 1]} : vector<8x192xf32> to vector<8x64xf32>
    %107 = arith.mulf %105, %90 : vector<8x64xf32>
    %108 = arith.mulf %104, %103 : vector<8x64xf32>
    %109 = arith.addf %107, %108 : vector<8x64xf32>
    %110 = math.tanh %109 : vector<8x64xf32>
    %111 = arith.mulf %106, %110 : vector<8x64xf32>
    %112 = vector.extract_strided_slice %13 {offsets = [40, 0], sizes = [8, 256], strides = [1, 1]} : vector<64x256xf32> to vector<8x256xf32>
    %cst_23 = arith.constant dense<0.000000e+00> : vector<8x256xf32>
    %113 = tpu.matmul %111, %14, %cst_23 {dimension_numbers = #tpu.dot_dimension_numbers<[1], [0], [0], [1], [0, 0, 1, 1], [], []>} : vector<8x64xf32>, vector<64x256xf32>, vector<8x256xf32> -> vector<8x256xf32>
    %114 = arith.addf %112, %113 : vector<8x256xf32>
    %115 = vector.extract_strided_slice %114 {offsets = [0, 0], sizes = [8, 192], strides = [1, 1]} : vector<8x256xf32> to vector<8x192xf32>
    %116 = arith.negf %115 : vector<8x192xf32>
    %117 = math.exp %116 : vector<8x192xf32>
    %cst_24 = arith.constant 1.000000e+00 : f32
    %118 = vector.broadcast %cst_24 : f32 to vector<8x192xf32>
    %119 = arith.addf %118, %117 : vector<8x192xf32>
    %120 = arith.divf %118, %119 : vector<8x192xf32>
    %121 = vector.extract_strided_slice %114 {offsets = [0, 192], sizes = [8, 64], strides = [1, 1]} : vector<8x256xf32> to vector<8x64xf32>
    %122 = math.tanh %121 : vector<8x64xf32>
    %123 = vector.extract_strided_slice %120 {offsets = [0, 0], sizes = [8, 64], strides = [1, 1]} : vector<8x192xf32> to vector<8x64xf32>
    %124 = vector.extract_strided_slice %120 {offsets = [0, 64], sizes = [8, 64], strides = [1, 1]} : vector<8x192xf32> to vector<8x64xf32>
    %125 = vector.extract_strided_slice %120 {offsets = [0, 128], sizes = [8, 64], strides = [1, 1]} : vector<8x192xf32> to vector<8x64xf32>
    %126 = arith.mulf %124, %109 : vector<8x64xf32>
    %127 = arith.mulf %123, %122 : vector<8x64xf32>
    %128 = arith.addf %126, %127 : vector<8x64xf32>
    %129 = math.tanh %128 : vector<8x64xf32>
    %130 = arith.mulf %125, %129 : vector<8x64xf32>
    %131 = vector.extract_strided_slice %13 {offsets = [48, 0], sizes = [8, 256], strides = [1, 1]} : vector<64x256xf32> to vector<8x256xf32>
    %cst_25 = arith.constant dense<0.000000e+00> : vector<8x256xf32>
    %132 = tpu.matmul %130, %14, %cst_25 {dimension_numbers = #tpu.dot_dimension_numbers<[1], [0], [0], [1], [0, 0, 1, 1], [], []>} : vector<8x64xf32>, vector<64x256xf32>, vector<8x256xf32> -> vector<8x256xf32>
    %133 = arith.addf %131, %132 : vector<8x256xf32>
    %134 = vector.extract_strided_slice %133 {offsets = [0, 0], sizes = [8, 192], strides = [1, 1]} : vector<8x256xf32> to vector<8x192xf32>
    %135 = arith.negf %134 : vector<8x192xf32>
    %136 = math.exp %135 : vector<8x192xf32>
    %cst_26 = arith.constant 1.000000e+00 : f32
    %137 = vector.broadcast %cst_26 : f32 to vector<8x192xf32>
    %138 = arith.addf %137, %136 : vector<8x192xf32>
    %139 = arith.divf %137, %138 : vector<8x192xf32>
    %140 = vector.extract_strided_slice %133 {offsets = [0, 192], sizes = [8, 64], strides = [1, 1]} : vector<8x256xf32> to vector<8x64xf32>
    %141 = math.tanh %140 : vector<8x64xf32>
    %142 = vector.extract_strided_slice %139 {offsets = [0, 0], sizes = [8, 64], strides = [1, 1]} : vector<8x192xf32> to vector<8x64xf32>
    %143 = vector.extract_strided_slice %139 {offsets = [0, 64], sizes = [8, 64], strides = [1, 1]} : vector<8x192xf32> to vector<8x64xf32>
    %144 = vector.extract_strided_slice %139 {offsets = [0, 128], sizes = [8, 64], strides = [1, 1]} : vector<8x192xf32> to vector<8x64xf32>
    %145 = arith.mulf %143, %128 : vector<8x64xf32>
    %146 = arith.mulf %142, %141 : vector<8x64xf32>
    %147 = arith.addf %145, %146 : vector<8x64xf32>
    %148 = math.tanh %147 : vector<8x64xf32>
    %149 = arith.mulf %144, %148 : vector<8x64xf32>
    %150 = vector.extract_strided_slice %13 {offsets = [56, 0], sizes = [8, 256], strides = [1, 1]} : vector<64x256xf32> to vector<8x256xf32>
    %cst_27 = arith.constant dense<0.000000e+00> : vector<8x256xf32>
    %151 = tpu.matmul %149, %14, %cst_27 {dimension_numbers = #tpu.dot_dimension_numbers<[1], [0], [0], [1], [0, 0, 1, 1], [], []>} : vector<8x64xf32>, vector<64x256xf32>, vector<8x256xf32> -> vector<8x256xf32>
    %152 = arith.addf %150, %151 : vector<8x256xf32>
    %153 = vector.extract_strided_slice %152 {offsets = [0, 0], sizes = [8, 192], strides = [1, 1]} : vector<8x256xf32> to vector<8x192xf32>
    %154 = arith.negf %153 : vector<8x192xf32>
    %155 = math.exp %154 : vector<8x192xf32>
    %cst_28 = arith.constant 1.000000e+00 : f32
    %156 = vector.broadcast %cst_28 : f32 to vector<8x192xf32>
    %157 = arith.addf %156, %155 : vector<8x192xf32>
    %158 = arith.divf %156, %157 : vector<8x192xf32>
    %159 = vector.extract_strided_slice %152 {offsets = [0, 192], sizes = [8, 64], strides = [1, 1]} : vector<8x256xf32> to vector<8x64xf32>
    %160 = math.tanh %159 : vector<8x64xf32>
    %161 = vector.extract_strided_slice %158 {offsets = [0, 0], sizes = [8, 64], strides = [1, 1]} : vector<8x192xf32> to vector<8x64xf32>
    %162 = vector.extract_strided_slice %158 {offsets = [0, 64], sizes = [8, 64], strides = [1, 1]} : vector<8x192xf32> to vector<8x64xf32>
    %163 = vector.extract_strided_slice %158 {offsets = [0, 128], sizes = [8, 64], strides = [1, 1]} : vector<8x192xf32> to vector<8x64xf32>
    %164 = arith.mulf %162, %147 : vector<8x64xf32>
    %165 = arith.mulf %161, %160 : vector<8x64xf32>
    %166 = arith.addf %164, %165 : vector<8x64xf32>
    %167 = math.tanh %166 : vector<8x64xf32>
    %168 = arith.mulf %163, %167 : vector<8x64xf32>
    %c0_29 = arith.constant 0 : index
    %c0_30 = arith.constant 0 : index
    %169 = vector.load %arg6[%c0_29, %c0_30] : memref<64x1xf32, #tpu.memory_space<vmem>>, vector<64x1xf32>
    %cst_31 = arith.constant dense<0.000000e+00> : vector<8x1xf32>
    %170 = tpu.matmul %168, %169, %cst_31 {dimension_numbers = #tpu.dot_dimension_numbers<[1], [0], [0], [1], [0, 0, 1, 1], [], []>} : vector<8x64xf32>, vector<64x1xf32>, vector<8x1xf32> -> vector<8x1xf32>
    %c0_32 = arith.constant 0 : index
    %171 = memref.load %arg7[%c0_32] : memref<1xf32, #tpu.memory_space<smem>>
    %172 = vector.broadcast %171 : f32 to vector<8x1xf32>
    %173 = arith.addf %170, %172 : vector<8x1xf32>
    %c0_33 = arith.constant 0 : index
    %c0_34 = arith.constant 0 : index
    %174 = vector.load %arg8[%c0_33, %c0_34] : memref<8x1xf32, #tpu.memory_space<vmem>>, vector<8x1xf32>
    tpu.vector_store %arg8[%c0_33, %c0_34], %173 {strides = array<i32>} : memref<8x1xf32, #tpu.memory_space<vmem>>, vector<8x1xf32>,
    return
  }
}

</mosaic_0001>

<llo_original>
// kernel: tpu_custom_call.1
$region0: #{tpu_custom_call.1}
  #allocation0 [shape = 'u32[]', space=smem, size = 0x4, offset = 0x4, fixed_abs, tag = 'smem constant byte address 0x4 - core index']
  #allocation1 [shape = 'u32[144,128]{1,0:T(1,128)}', space=vmem, size = 0x12000, scoped, tag = 'internal scratch']
  #allocation2 [shape = 'f32[1]{0:T(128)S(6)}', space=smem, size = 0x200, scoped, tag = 'scoped memory for tpu_custom_call.1']
  %s0 = inlined_call_operand.vmem [shape: f32[64,1], index: 0, kind: input, shape index: {}]
  %s1 = inlined_call_operand.vmem [shape: f32[1,4], index: 1, kind: input, shape index: {}]
  %s2 = inlined_call_operand.vmem [shape: f32[1,4], index: 2, kind: input, shape index: {}]
  %s3 = inlined_call_operand.vmem [shape: f32[4,256], index: 3, kind: input, shape index: {}]
  %s4 = inlined_call_operand.vmem [shape: f32[64,256], index: 4, kind: input, shape index: {}]
  %s5 = inlined_call_operand.vmem [shape: f32[1,256], index: 5, kind: input, shape index: {}]
  %s6 = inlined_call_operand.vmem [shape: f32[64,1], index: 6, kind: input, shape index: {}]
  %s7 = inlined_call_operand.<no memory space> [shape: f32[1], index: 7, kind: input, shape index: {}]
  %s8 = inlined_call_operand.vmem [shape: f32[8,1], index: 8, kind: output, shape index: {}]
  %s9 = sld [smem:[#allocation0]]
  $region42: #{tpu_custom_call.1} parent=0
    _
  %s11 = ssub.s32 1, %s9
  %s12 = scalar_select 0, %s11, %s9
  %13 = sst [smem:[#allocation2]] %s7
  // Predicated region
  $region2: #{tpu_custom_call.1} parent=0 // pred_check
    _
  $region3: #{tpu_custom_call.1} parent=0 // pred_check_branch
    %15 = sbr.rel (0) target = $region5
  $region4: #{tpu_custom_call.1} parent=0 // pred_region
    _
  $region5: #{tpu_custom_call.1} parent=0 // pred_fallthru
    _
  // Predicated region
  $region6: #{tpu_custom_call.1} parent=0 // pred_check
    _
  $region7: #{tpu_custom_call.1} parent=0 // pred_check_branch
    %17 = sbr.rel (0) target = $region9
  $region8: #{tpu_custom_call.1} parent=0 // pred_region
    _
  $region9: #{tpu_custom_call.1} parent=0 // pred_fallthru
    _
  // Predicated region
  $region10: #{tpu_custom_call.1} parent=0 // pred_check
    _
  $region11: #{tpu_custom_call.1} parent=0 // pred_check_branch
    %19 = sbr.rel (0) target = $region13
  $region12: #{tpu_custom_call.1} parent=0 // pred_region
    _
  $region13: #{tpu_custom_call.1} parent=0 // pred_fallthru
    _
  // Predicated region
  $region14: #{tpu_custom_call.1} parent=0 // pred_check
    _
  $region15: #{tpu_custom_call.1} parent=0 // pred_check_branch
    %21 = sbr.rel (0) target = $region17
  $region16: #{tpu_custom_call.1} parent=0 // pred_region
    _
  $region17: #{tpu_custom_call.1} parent=0 // pred_fallthru
    _
  // Predicated region
  $region18: #{tpu_custom_call.1} parent=0 // pred_check
    _
  $region19: #{tpu_custom_call.1} parent=0 // pred_check_branch
    %23 = sbr.rel (0) target = $region21
  $region20: #{tpu_custom_call.1} parent=0 // pred_region
    _
  $region21: #{tpu_custom_call.1} parent=0 // pred_fallthru
    _
  // Predicated region
  $region22: #{tpu_custom_call.1} parent=0 // pred_check
    _
  $region23: #{tpu_custom_call.1} parent=0 // pred_check_branch
    %25 = sbr.rel (0) target = $region25
  $region24: #{tpu_custom_call.1} parent=0 // pred_region
    _
  $region25: #{tpu_custom_call.1} parent=0 // pred_fallthru
    _
  // Predicated region
  $region26: #{tpu_custom_call.1} parent=0 // pred_check
    _
  $region27: #{tpu_custom_call.1} parent=0 // pred_check_branch
    %27 = sbr.rel (0) target = $region29
  $region28: #{tpu_custom_call.1} parent=0 // pred_region
    _
  $region29: #{tpu_custom_call.1} parent=0 // pred_fallthru
    _
  // Predicated region
  $region30: #{tpu_custom_call.1} parent=0 // pred_check
    _
  $region31: #{tpu_custom_call.1} parent=0 // pred_check_branch
    %29 = sbr.rel (0) target = $region33
  $region32: #{tpu_custom_call.1} parent=0 // pred_region
    _
  $region33: #{tpu_custom_call.1} parent=0 // pred_fallthru
    _
  %v30 = vld [vmem:[%s0] sm:$0xff]
  %v31 = vld [vmem:[%s0 + $0x8] sm:$0xff]
  %v32 = vld [vmem:[%s0 + $0x10] sm:$0xff]
  %v33 = vld [vmem:[%s0 + $0x18] sm:$0xff]
  %v34 = vld [vmem:[%s0 + $0x20] sm:$0xff]
  %v35 = vld [vmem:[%s0 + $0x28] sm:$0xff]
  %v36 = vld [vmem:[%s0 + $0x30] sm:$0xff]
  %v37 = vld [vmem:[%s0 + $0x38] sm:$0xff]
  %v38 = vld [vmem:[%s1] sm:$0x1]
  %40 = vset.pattern.permute.xlu0 0
  %41 = vperm.xlu0 %40, %v30
  %v42 = vpop.permute.xlu0 %41
  %45 = vset.pattern.permute.xlu0 0
  %46 = vperm.xlu0 %45, %v31
  %v47 = vpop.permute.xlu0 %46
  %50 = vset.pattern.permute.xlu0 0
  %51 = vperm.xlu0 %50, %v32
  %v52 = vpop.permute.xlu0 %51
  %55 = vset.pattern.permute.xlu0 0
  %56 = vperm.xlu0 %55, %v33
  %v57 = vpop.permute.xlu0 %56
  %60 = vset.pattern.permute.xlu0 0
  %61 = vperm.xlu0 %60, %v34
  %v62 = vpop.permute.xlu0 %61
  %65 = vset.pattern.permute.xlu0 0
  %66 = vperm.xlu0 %65, %v35
  %v67 = vpop.permute.xlu0 %66
  %70 = vset.pattern.permute.xlu0 0
  %71 = vperm.xlu0 %70, %v36
  %v72 = vpop.permute.xlu0 %71
  %75 = vset.pattern.permute.xlu0 0
  %76 = vperm.xlu0 %75, %v37
  %v77 = vpop.permute.xlu0 %76
  %v80 = vlaneseq
  %v81 = vshrl.u32 %v80, 7
  %v82 = vsub.s32 0, %v81
  %v83 = vrot.slane %v38, %v82
  %v85 = vmul.f32 %v42, %v83
  %v86 = vmul.f32 %v47, %v83
  %v87 = vmul.f32 %v52, %v83
  %v88 = vmul.f32 %v57, %v83
  %v89 = vmul.f32 %v62, %v83
  %v90 = vmul.f32 %v67, %v83
  %v91 = vmul.f32 %v72, %v83
  %v92 = vmul.f32 %v77, %v83
  %v93 = vld [vmem:[%s2] sm:$0x1]
  %v95 = vlaneseq
  %v96 = vshrl.u32 %v95, 7
  %v97 = vsub.s32 0, %v96
  %v98 = vrot.slane %v93, %v97
  %v100 = vadd.f32 %v85, %v98
  %v101 = vadd.f32 %v86, %v98
  %v102 = vadd.f32 %v87, %v98
  %v103 = vadd.f32 %v88, %v98
  %v104 = vadd.f32 %v89, %v98
  %v105 = vadd.f32 %v90, %v98
  %v106 = vadd.f32 %v91, %v98
  %v107 = vadd.f32 %v92, %v98
  %v108 = vtanh.pop %v100
  %v109 = vtanh.pop %v101
  %v110 = vtanh.pop %v102
  %v111 = vtanh.pop %v103
  %v112 = vtanh.pop %v104
  %v113 = vtanh.pop %v105
  %v114 = vtanh.pop %v106
  %v115 = vtanh.pop %v107
  %v116 = vld [vmem:[%s3] sm:$0xff]
  %v117 = vld [vmem:[%s5] sm:$0x3]
  %v119 = vlaneseq
  %v120 = vshrl.u32 %v119, 7
  %v121 = vsub.s32 0, %v120
  %v122 = vrot.slane %v117, %v121
  %v123 = vlaneseq
  %v124 = vshrl.u32 %v123, 7
  %v125 = vsub.s32 1, %v124
  %v126 = vrot.slane %v117, %v125
  %v130 = vcombine.high %v116, %v116
  %vm131 = vcmask 31744
  %v133 = vsel %vm131, %v108, 0
  %v136 = vsel %vm131, %v109, 0
  %v139 = vsel %vm131, %v110, 0
  %v142 = vsel %vm131, %v111, 0
  %v145 = vsel %vm131, %v112, 0
  %v148 = vsel %vm131, %v113, 0
  %v151 = vsel %vm131, %v114, 0
  %v154 = vsel %vm131, %v115, 0
  %vm156 = vcmask 1043456
  %v157 = vsel %vm156, %v116, 0
  %v159 = vsel %vm156, %v130, 0
  %161 = vmatprep.subr.mxu0 %v159
  %162 = vmatpush1.msra.mxu0 %v157
  %163 = vmatprep.subr.mxu0 0.0
  %164 = vmatpush1.msra.mxu0 0.0
  %165 = vmatprep.subr.mxu0 0.0
  %166 = vmatpush1.msra.mxu0 0.0
  %167 = vmatprep.subr.mxu0 0.0
  %168 = vmatpush1.msra.mxu0 0.0
  %169 = vmatprep.subr.mxu0 0.0
  %170 = vmatpush1.msra.mxu0 0.0
  %171 = vmatprep.subr.mxu0 0.0
  %172 = vmatpush1.msra.mxu0 0.0
  %173 = vmatprep.subr.mxu0 0.0
  %174 = vmatpush1.msra.mxu0 0.0
  %175 = vmatprep.subr.mxu0 0.0
  %176 = vmatpush1.msra.mxu0 0.0
  %177 = vmatprep.subr.mxu0 0.0
  %178 = vmatpush1.msra.mxu0 0.0
  %179 = vmatprep.subr.mxu0 0.0
  %180 = vmatpush1.msra.mxu0 0.0
  %181 = vmatprep.subr.mxu0 0.0
  %182 = vmatpush1.msra.mxu0 0.0
  %183 = vmatprep.subr.mxu0 0.0
  %184 = vmatpush1.msra.mxu0 0.0
  %185 = vmatprep.subr.mxu0 0.0
  %186 = vmatpush1.msra.mxu0 0.0
  %187 = vmatprep.subr.mxu0 0.0
  %188 = vmatpush1.msra.mxu0 0.0
  %189 = vmatprep.subr.mxu0 0.0
  %190 = vmatpush1.msra.mxu0 0.0
  %191 = vmatprep.subr.mxu0 0.0
  %192 = vmatpush1.msra.mxu0 0.0
  %193 = vmatprep.subr.mxu0 0.0
  %194 = vmatpush1.msra.mxu0 0.0
  %195 = vmatprep.subr.mxu0 0.0
  %196 = vmatpush1.msra.mxu0 0.0
  %197 = vmatprep.subr.mxu0 0.0
  %198 = vmatpush1.msra.mxu0 0.0
  %199 = vmatprep.subr.mxu0 0.0
  %200 = vmatpush1.msra.mxu0 0.0
  %201 = vmatprep.subr.mxu0 0.0
  %202 = vmatpush1.msra.mxu0 0.0
  %203 = vmatprep.subr.mxu0 0.0
  %204 = vmatpush1.msra.mxu0 0.0
  %205 = vmatprep.subr.mxu0 0.0
  %206 = vmatpush1.msra.mxu0 0.0
  %207 = vmatprep.subr.mxu0 0.0
  %208 = vmatpush1.msra.mxu0 0.0
  %209 = vmatprep.subr.mxu0 0.0
  %210 = vmatpush1.msra.mxu0 0.0
  %211 = vmatprep.subr.mxu0 0.0
  %212 = vmatpush1.msra.mxu0 0.0
  %213 = vmatprep.subr.mxu0 0.0
  %214 = vmatpush1.msra.mxu0 0.0
  %215 = vmatprep.subr.mxu0 0.0
  %216 = vmatpush1.msra.mxu0 0.0
  %217 = vmatprep.subr.mxu0 0.0
  %218 = vmatpush1.msra.mxu0 0.0
  %219 = vmatprep.subr.mxu0 0.0
  %220 = vmatpush1.msra.mxu0 0.0
  %221 = vmatprep.subr.mxu0 0.0
  %222 = vmatpush1.msra.mxu0 0.0
  %223 = vmatprep.subr.mxu0 0.0
  %224 = vmatpush1.msra.mxu0 0.0
  %225 = vmatprep.mubr.f32.mxu0 0.0
  %226 = vmatmul.mubr.f32.gmra.mrb[0].mxu0 %v133
  %v227 = vpop.f32.mrb[0].mxu0
  %v228 = vadd.f32 %v122, %v227
  %v229 = vpop.f32.mrb[0].mxu0
  %v230 = vadd.f32 %v126, %v229
  %231 = vmatprep.mubr.f32.mxu0 0.0
  %232 = vmatmul.mubr.f32.gmra.mrb[0].mxu0 %v136
  %v233 = vpop.f32.mrb[0].mxu0
  %v234 = vadd.f32 %v122, %v233
  %v235 = vpop.f32.mrb[0].mxu0
  %v236 = vadd.f32 %v126, %v235
  %237 = vmatprep.mubr.f32.mxu0 0.0
  %238 = vmatmul.mubr.f32.gmra.mrb[0].mxu0 %v139
  %v239 = vpop.f32.mrb[0].mxu0
  %v240 = vadd.f32 %v122, %v239
  %v241 = vpop.f32.mrb[0].mxu0
  %v242 = vadd.f32 %v126, %v241
  %243 = vmatprep.mubr.f32.mxu0 0.0
  %244 = vmatmul.mubr.f32.gmra.mrb[0].mxu0 %v142
  %v245 = vpop.f32.mrb[0].mxu0
  %v246 = vadd.f32 %v122, %v245
  %v247 = vpop.f32.mrb[0].mxu0
  %v248 = vadd.f32 %v126, %v247
  %249 = vmatprep.mubr.f32.mxu0 0.0
  %250 = vmatmul.mubr.f32.gmra.mrb[0].mxu0 %v145
  %v251 = vpop.f32.mrb[0].mxu0
  %v252 = vadd.f32 %v122, %v251
  %v253 = vpop.f32.mrb[0].mxu0
  %v254 = vadd.f32 %v126, %v253
  %255 = vmatprep.mubr.f32.mxu0 0.0
  %256 = vmatmul.mubr.f32.gmra.mrb[0].mxu0 %v148
  %v257 = vpop.f32.mrb[0].mxu0
  %v258 = vadd.f32 %v122, %v257
  %v259 = vpop.f32.mrb[0].mxu0
  %v260 = vadd.f32 %v126, %v259
  %261 = vmatprep.mubr.f32.mxu0 0.0
  %262 = vmatmul.mubr.f32.gmra.mrb[0].mxu0 %v151
  %v263 = vpop.f32.mrb[0].mxu0
  %v264 = vadd.f32 %v122, %v263
  %v265 = vpop.f32.mrb[0].mxu0
  %v266 = vadd.f32 %v126, %v265
  %267 = vmatprep.mubr.f32.mxu0 0.0
  %268 = vmatmul.mubr.f32.gmra.mrb[0].mxu0 %v154
  %v269 = vpop.f32.mrb[0].mxu0
  %v270 = vadd.f32 %v122, %v269
  %v271 = vpop.f32.mrb[0].mxu0
  %v272 = vadd.f32 %v126, %v271
  %273 = vdwg.mxu0
  %v274 = vld [vmem:[%s4] sm:$0xff]
  %v275 = vld [vmem:[%s4 + $0x8] sm:$0xff]
  %v276 = vld [vmem:[%s4 + $0x10] sm:$0xff]
  %v277 = vld [vmem:[%s4 + $0x18] sm:$0xff]
  %v278 = vld [vmem:[%s4 + $0x20] sm:$0xff]
  %v279 = vld [vmem:[%s4 + $0x28] sm:$0xff]
  %v280 = vld [vmem:[%s4 + $0x30] sm:$0xff]
  %v281 = vld [vmem:[%s4 + $0x38] sm:$0xff]
  %v282 = vld [vmem:[%s4 + $0x40] sm:$0xff]
  %v283 = vld [vmem:[%s4 + $0x48] sm:$0xff]
  %v284 = vld [vmem:[%s4 + $0x50] sm:$0xff]
  %v285 = vld [vmem:[%s4 + $0x58] sm:$0xff]
  %v286 = vld [vmem:[%s4 + $0x60] sm:$0xff]
  %v287 = vld [vmem:[%s4 + $0x68] sm:$0xff]
  %v288 = vld [vmem:[%s4 + $0x70] sm:$0xff]
  %v289 = vld [vmem:[%s4 + $0x78] sm:$0xff]
  %vm290 = vcmask 523264
  %v292 = vsel %vm290, 0.0, 0
  %294 = vmatprep.subr.mxu0 %v275
  %295 = vmatpush1.msra.mxu0 %v274
  %296 = vmatprep.subr.mxu0 %v277
  %297 = vmatpush1.msra.mxu0 %v276
  %298 = vmatprep.subr.mxu0 %v279
  %299 = vmatpush1.msra.mxu0 %v278
  %300 = vmatprep.subr.mxu0 %v281
  %301 = vmatpush1.msra.mxu0 %v280
  %302 = vmatprep.subr.mxu0 %v283
  %303 = vmatpush1.msra.mxu0 %v282
  %304 = vmatprep.subr.mxu0 %v285
  %305 = vmatpush1.msra.mxu0 %v284
  %306 = vmatprep.subr.mxu0 %v287
  %307 = vmatpush1.msra.mxu0 %v286
  %308 = vmatprep.subr.mxu0 %v289
  %309 = vmatpush1.msra.mxu0 %v288
  %310 = vmatprep.subr.mxu0 0.0
  %311 = vmatpush1.msra.mxu0 0.0
  %312 = vmatprep.subr.mxu0 0.0
  %313 = vmatpush1.msra.mxu0 0.0
  %314 = vmatprep.subr.mxu0 0.0
  %315 = vmatpush1.msra.mxu0 0.0
  %316 = vmatprep.subr.mxu0 0.0
  %317 = vmatpush1.msra.mxu0 0.0
  %318 = vmatprep.subr.mxu0 0.0
  %319 = vmatpush1.msra.mxu0 0.0
  %320 = vmatprep.subr.mxu0 0.0
  %321 = vmatpush1.msra.mxu0 0.0
  %322 = vmatprep.subr.mxu0 0.0
  %323 = vmatpush1.msra.mxu0 0.0
  %324 = vmatprep.subr.mxu0 0.0
  %325 = vmatpush1.msra.mxu0 0.0
  %326 = vmatprep.subr.mxu0 0.0
  %327 = vmatpush1.msra.mxu0 0.0
  %328 = vmatprep.subr.mxu0 0.0
  %329 = vmatpush1.msra.mxu0 0.0
  %330 = vmatprep.subr.mxu0 0.0
  %331 = vmatpush1.msra.mxu0 0.0
  %332 = vmatprep.subr.mxu0 0.0
  %333 = vmatpush1.msra.mxu0 0.0
  %334 = vmatprep.subr.mxu0 0.0
  %335 = vmatpush1.msra.mxu0 0.0
  %336 = vmatprep.subr.mxu0 0.0
  %337 = vmatpush1.msra.mxu0 0.0
  %338 = vmatprep.subr.mxu0 0.0
  %339 = vmatpush1.msra.mxu0 0.0
  %340 = vmatprep.subr.mxu0 0.0
  %341 = vmatpush1.msra.mxu0 0.0
  %342 = vmatprep.subr.mxu0 0.0
  %343 = vmatpush1.msra.mxu0 0.0
  %344 = vmatprep.subr.mxu0 0.0
  %345 = vmatpush1.msra.mxu0 0.0
  %346 = vmatprep.subr.mxu0 0.0
  %347 = vmatpush1.msra.mxu0 0.0
  %348 = vmatprep.subr.mxu0 0.0
  %349 = vmatpush1.msra.mxu0 0.0
  %350 = vmatprep.subr.mxu0 0.0
  %351 = vmatpush1.msra.mxu0 0.0
  %352 = vmatprep.subr.mxu0 0.0
  %353 = vmatpush1.msra.mxu0 0.0
  %354 = vmatprep.subr.mxu0 0.0
  %355 = vmatpush1.msra.mxu0 0.0
  %356 = vmatprep.subr.mxu0 0.0
  %357 = vmatpush1.msra.mxu0 0.0
  %358 = vmatprep.mubr.f32.mxu0 0.0
  %359 = vmatmul.mubr.f32.gmra.mrb[0].mxu0 %v292
  %v360 = vpop.f32.mrb[0].mxu0
  %v361 = vadd.f32 0.0, %v360
  %v362 = vpop.f32.mrb[0].mxu0
  %v363 = vadd.f32 0.0, %v362
  %364 = vdwg.mxu0
  %v365 = vadd.f32 %v228, %v361
  %v366 = vadd.f32 %v230, %v363
  %v367 = vxor.u32 %v365, 2147483648
  %v368 = vxor.u32 %v366, 2147483648
  %v369 = vmul.f32 %v367, 1.442695
  %v370 = vpow.pop %v369
  %v371 = vmul.f32 %v368, 1.442695
  %v372 = vpow.pop %v371
  %v373 = vadd.f32 %v370, 1.0
  %v374 = vadd.f32 %v372, 1.0
  %v375 = vrcp.pop %v373
  %v376 = vmul.f32 1.0, %v375
  %v377 = vrcp.pop %v374
  %v378 = vmul.f32 1.0, %v377
  %v379 = vtanh.pop %v366
  %v380 = vmul.f32 %v376, 0.0
  %382 = vrot.lane.b32.xlu0 %v379, 64
  %v383 = vpop.permute.xlu0 %382
  %v385 = vmul.f32 %v376, %v383
  %387 = vrot.lane.b32.xlu0 %v385, 64
  %v388 = vpop.permute.xlu0 %387
  %v390 = vadd.f32 %v380, %v388
  %v391 = vtanh.pop %v390
  %393 = vrot.lane.b32.xlu0 %v391, 64
  %v394 = vpop.permute.xlu0 %393
  %v396 = vmul.f32 %v378, %v394
  %v398 = vsel %vm290, %v396, 0
  %400 = vmatprep.subr.mxu0 %v275
  %401 = vmatpush1.msra.mxu0 %v274
  %402 = vmatprep.subr.mxu0 %v277
  %403 = vmatpush1.msra.mxu0 %v276
  %404 = vmatprep.subr.mxu0 %v279
  %405 = vmatpush1.msra.mxu0 %v278
  %406 = vmatprep.subr.mxu0 %v281
  %407 = vmatpush1.msra.mxu0 %v280
  %408 = vmatprep.subr.mxu0 %v283
  %409 = vmatpush1.msra.mxu0 %v282
  %410 = vmatprep.subr.mxu0 %v285
  %411 = vmatpush1.msra.mxu0 %v284
  %412 = vmatprep.subr.mxu0 %v287
  %413 = vmatpush1.msra.mxu0 %v286
  %414 = vmatprep.subr.mxu0 %v289
  %415 = vmatpush1.msra.mxu0 %v288
  %416 = vmatprep.subr.mxu0 0.0
  %417 = vmatpush1.msra.mxu0 0.0
  %418 = vmatprep.subr.mxu0 0.0
  %419 = vmatpush1.msra.mxu0 0.0
  %420 = vmatprep.subr.mxu0 0.0
  %421 = vmatpush1.msra.mxu0 0.0
  %422 = vmatprep.subr.mxu0 0.0
  %423 = vmatpush1.msra.mxu0 0.0
  %424 = vmatprep.subr.mxu0 0.0
  %425 = vmatpush1.msra.mxu0 0.0
  %426 = vmatprep.subr.mxu0 0.0
  %427 = vmatpush1.msra.mxu0 0.0
  %428 = vmatprep.subr.mxu0 0.0
  %429 = vmatpush1.msra.mxu0 0.0
  %430 = vmatprep.subr.mxu0 0.0
  %431 = vmatpush1.msra.mxu0 0.0
  %432 = vmatprep.subr.mxu0 0.0
  %433 = vmatpush1.msra.mxu0 0.0
  %434 = vmatprep.subr.mxu0 0.0
  %435 = vmatpush1.msra.mxu0 0.0
  %436 = vmatprep.subr.mxu0 0.0
  %437 = vmatpush1.msra.mxu0 0.0
  %438 = vmatprep.subr.mxu0 0.0
  %439 = vmatpush1.msra.mxu0 0.0
  %440 = vmatprep.subr.mxu0 0.0
  %441 = vmatpush1.msra.mxu0 0.0
  %442 = vmatprep.subr.mxu0 0.0
  %443 = vmatpush1.msra.mxu0 0.0
  %444 = vmatprep.subr.mxu0 0.0
  %445 = vmatpush1.msra.mxu0 0.0
  %446 = vmatprep.subr.mxu0 0.0
  %447 = vmatpush1.msra.mxu0 0.0
  %448 = vmatprep.subr.mxu0 0.0
  %449 = vmatpush1.msra.mxu0 0.0
  %450 = vmatprep.subr.mxu0 0.0
  %451 = vmatpush1.msra.mxu0 0.0
  %452 = vmatprep.subr.mxu0 0.0
  %453 = vmatpush1.msra.mxu0 0.0
  %454 = vmatprep.subr.mxu0 0.0
  %455 = vmatpush1.msra.mxu0 0.0
  %456 = vmatprep.subr.mxu0 0.0
  %457 = vmatpush1.msra.mxu0 0.0
  %458 = vmatprep.subr.mxu0 0.0
  %459 = vmatpush1.msra.mxu0 0.0
  %460 = vmatprep.subr.mxu0 0.0
  %461 = vmatpush1.msra.mxu0 0.0
  %462 = vmatprep.subr.mxu0 0.0
  %463 = vmatpush1.msra.mxu0 0.0
  %464 = vmatprep.mubr.f32.mxu0 0.0
  %465 = vmatmul.mubr.f32.gmra.mrb[0].mxu0 %v398
  %v466 = vpop.f32.mrb[0].mxu0
  %v467 = vadd.f32 0.0, %v466
  %v468 = vpop.f32.mrb[0].mxu0
  %v469 = vadd.f32 0.0, %v468
  %470 = vdwg.mxu0
  %v471 = vadd.f32 %v234, %v467
  %v472 = vadd.f32 %v236, %v469
  %v473 = vxor.u32 %v471, 2147483648
  %v474 = vxor.u32 %v472, 2147483648
  %v475 = vmul.f32 %v473, 1.442695
  %v476 = vpow.pop %v475
  %v477 = vmul.f32 %v474, 1.442695
  %v478 = vpow.pop %v477
  %v479 = vadd.f32 %v476, 1.0
  %v480 = vadd.f32 %v478, 1.0
  %v481 = vrcp.pop %v479
  %v482 = vmul.f32 1.0, %v481
  %v483 = vrcp.pop %v480
  %v484 = vmul.f32 1.0, %v483
  %v485 = vtanh.pop %v472
  %v486 = vmul.f32 %v482, %v390
  %488 = vrot.lane.b32.xlu0 %v485, 64
  %v489 = vpop.permute.xlu0 %488
  %v491 = vmul.f32 %v482, %v489
  %493 = vrot.lane.b32.xlu0 %v491, 64
  %v494 = vpop.permute.xlu0 %493
  %v496 = vadd.f32 %v486, %v494
  %v497 = vtanh.pop %v496
  %499 = vrot.lane.b32.xlu0 %v497, 64
  %v500 = vpop.permute.xlu0 %499
  %v502 = vmul.f32 %v484, %v500
  %v504 = vsel %vm290, %v502, 0
  %506 = vmatprep.subr.mxu0 %v275
  %507 = vmatpush1.msra.mxu0 %v274
  %508 = vmatprep.subr.mxu0 %v277
  %509 = vmatpush1.msra.mxu0 %v276
  %510 = vmatprep.subr.mxu0 %v279
  %511 = vmatpush1.msra.mxu0 %v278
  %512 = vmatprep.subr.mxu0 %v281
  %513 = vmatpush1.msra.mxu0 %v280
  %514 = vmatprep.subr.mxu0 %v283
  %515 = vmatpush1.msra.mxu0 %v282
  %516 = vmatprep.subr.mxu0 %v285
  %517 = vmatpush1.msra.mxu0 %v284
  %518 = vmatprep.subr.mxu0 %v287
  %519 = vmatpush1.msra.mxu0 %v286
  %520 = vmatprep.subr.mxu0 %v289
  %521 = vmatpush1.msra.mxu0 %v288
  %522 = vmatprep.subr.mxu0 0.0
  %523 = vmatpush1.msra.mxu0 0.0
  %524 = vmatprep.subr.mxu0 0.0
  %525 = vmatpush1.msra.mxu0 0.0
  %526 = vmatprep.subr.mxu0 0.0
  %527 = vmatpush1.msra.mxu0 0.0
  %528 = vmatprep.subr.mxu0 0.0
  %529 = vmatpush1.msra.mxu0 0.0
  %530 = vmatprep.subr.mxu0 0.0
  %531 = vmatpush1.msra.mxu0 0.0
  %532 = vmatprep.subr.mxu0 0.0
  %533 = vmatpush1.msra.mxu0 0.0
  %534 = vmatprep.subr.mxu0 0.0
  %535 = vmatpush1.msra.mxu0 0.0
  %536 = vmatprep.subr.mxu0 0.0
  %537 = vmatpush1.msra.mxu0 0.0
  %538 = vmatprep.subr.mxu0 0.0
  %539 = vmatpush1.msra.mxu0 0.0
  %540 = vmatprep.subr.mxu0 0.0
  %541 = vmatpush1.msra.mxu0 0.0
  %542 = vmatprep.subr.mxu0 0.0
  %543 = vmatpush1.msra.mxu0 0.0
  %544 = vmatprep.subr.mxu0 0.0
  %545 = vmatpush1.msra.mxu0 0.0
  %546 = vmatprep.subr.mxu0 0.0
  %547 = vmatpush1.msra.mxu0 0.0
  %548 = vmatprep.subr.mxu0 0.0
  %549 = vmatpush1.msra.mxu0 0.0
  %550 = vmatprep.subr.mxu0 0.0
  %551 = vmatpush1.msra.mxu0 0.0
  %552 = vmatprep.subr.mxu0 0.0
  %553 = vmatpush1.msra.mxu0 0.0
  %554 = vmatprep.subr.mxu0 0.0
  %555 = vmatpush1.msra.mxu0 0.0
  %556 = vmatprep.subr.mxu0 0.0
  %557 = vmatpush1.msra.mxu0 0.0
  %558 = vmatprep.subr.mxu0 0.0
  %559 = vmatpush1.msra.mxu0 0.0
  %560 = vmatprep.subr.mxu0 0.0
  %561 = vmatpush1.msra.mxu0 0.0
  %562 = vmatprep.subr.mxu0 0.0
  %563 = vmatpush1.msra.mxu0 0.0
  %564 = vmatprep.subr.mxu0 0.0
  %565 = vmatpush1.msra.mxu0 0.0
  %566 = vmatprep.subr.mxu0 0.0
  %567 = vmatpush1.msra.mxu0 0.0
  %568 = vmatprep.subr.mxu0 0.0
  %569 = vmatpush1.msra.mxu0 0.0
  %570 = vmatprep.mubr.f32.mxu0 0.0
  %571 = vmatmul.mubr.f32.gmra.mrb[0].mxu0 %v504
  %v572 = vpop.f32.mrb[0].mxu0
  %v573 = vadd.f32 0.0, %v572
  %v574 = vpop.f32.mrb[0].mxu0
  %v575 = vadd.f32 0.0, %v574
  %576 = vdwg.mxu0
  %v577 = vadd.f32 %v240, %v573
  %v578 = vadd.f32 %v242, %v575
  %v579 = vxor.u32 %v577, 2147483648
  %v580 = vxor.u32 %v578, 2147483648
  %v581 = vmul.f32 %v579, 1.442695
  %v582 = vpow.pop %v581
  %v583 = vmul.f32 %v580, 1.442695
  %v584 = vpow.pop %v583
  %v585 = vadd.f32 %v582, 1.0
  %v586 = vadd.f32 %v584, 1.0
  %v587 = vrcp.pop %v585
  %v588 = vmul.f32 1.0, %v587
  %v589 = vrcp.pop %v586
  %v590 = vmul.f32 1.0, %v589
  %v591 = vtanh.pop %v578
  %v592 = vmul.f32 %v588, %v496
  %594 = vrot.lane.b32.xlu0 %v591, 64
  %v595 = vpop.permute.xlu0 %594
  %v597 = vmul.f32 %v588, %v595
  %599 = vrot.lane.b32.xlu0 %v597, 64
  %v600 = vpop.permute.xlu0 %599
  %v602 = vadd.f32 %v592, %v600
  %v603 = vtanh.pop %v602
  %605 = vrot.lane.b32.xlu0 %v603, 64
  %v606 = vpop.permute.xlu0 %605
  %v608 = vmul.f32 %v590, %v606
  %v610 = vsel %vm290, %v608, 0
  %612 = vmatprep.subr.mxu0 %v275
  %613 = vmatpush1.msra.mxu0 %v274
  %614 = vmatprep.subr.mxu0 %v277
  %615 = vmatpush1.msra.mxu0 %v276
  %616 = vmatprep.subr.mxu0 %v279
  %617 = vmatpush1.msra.mxu0 %v278
  %618 = vmatprep.subr.mxu0 %v281
  %619 = vmatpush1.msra.mxu0 %v280
  %620 = vmatprep.subr.mxu0 %v283
  %621 = vmatpush1.msra.mxu0 %v282
  %622 = vmatprep.subr.mxu0 %v285
  %623 = vmatpush1.msra.mxu0 %v284
  %624 = vmatprep.subr.mxu0 %v287
  %625 = vmatpush1.msra.mxu0 %v286
  %626 = vmatprep.subr.mxu0 %v289
  %627 = vmatpush1.msra.mxu0 %v288
  %628 = vmatprep.subr.mxu0 0.0
  %629 = vmatpush1.msra.mxu0 0.0
  %630 = vmatprep.subr.mxu0 0.0
  %631 = vmatpush1.msra.mxu0 0.0
  %632 = vmatprep.subr.mxu0 0.0
  %633 = vmatpush1.msra.mxu0 0.0
  %634 = vmatprep.subr.mxu0 0.0
  %635 = vmatpush1.msra.mxu0 0.0
  %636 = vmatprep.subr.mxu0 0.0
  %637 = vmatpush1.msra.mxu0 0.0
  %638 = vmatprep.subr.mxu0 0.0
  %639 = vmatpush1.msra.mxu0 0.0
  %640 = vmatprep.subr.mxu0 0.0
  %641 = vmatpush1.msra.mxu0 0.0
  %642 = vmatprep.subr.mxu0 0.0
  %643 = vmatpush1.msra.mxu0 0.0
  %644 = vmatprep.subr.mxu0 0.0
  %645 = vmatpush1.msra.mxu0 0.0
  %646 = vmatprep.subr.mxu0 0.0
  %647 = vmatpush1.msra.mxu0 0.0
  %648 = vmatprep.subr.mxu0 0.0
  %649 = vmatpush1.msra.mxu0 0.0
  %650 = vmatprep.subr.mxu0 0.0
  %651 = vmatpush1.msra.mxu0 0.0
  %652 = vmatprep.subr.mxu0 0.0
  %653 = vmatpush1.msra.mxu0 0.0
  %654 = vmatprep.subr.mxu0 0.0
  %655 = vmatpush1.msra.mxu0 0.0
  %656 = vmatprep.subr.mxu0 0.0
  %657 = vmatpush1.msra.mxu0 0.0
  %658 = vmatprep.subr.mxu0 0.0
  %659 = vmatpush1.msra.mxu0 0.0
  %660 = vmatprep.subr.mxu0 0.0
  %661 = vmatpush1.msra.mxu0 0.0
  %662 = vmatprep.subr.mxu0 0.0
  %663 = vmatpush1.msra.mxu0 0.0
  %664 = vmatprep.subr.mxu0 0.0
  %665 = vmatpush1.msra.mxu0 0.0
  %666 = vmatprep.subr.mxu0 0.0
  %667 = vmatpush1.msra.mxu0 0.0
  %668 = vmatprep.subr.mxu0 0.0
  %669 = vmatpush1.msra.mxu0 0.0
  %670 = vmatprep.subr.mxu0 0.0
  %671 = vmatpush1.msra.mxu0 0.0
  %672 = vmatprep.subr.mxu0 0.0
  %673 = vmatpush1.msra.mxu0 0.0
  %674 = vmatprep.subr.mxu0 0.0
  %675 = vmatpush1.msra.mxu0 0.0
  %676 = vmatprep.mubr.f32.mxu0 0.0
  %677 = vmatmul.mubr.f32.gmra.mrb[0].mxu0 %v610
  %v678 = vpop.f32.mrb[0].mxu0
  %v679 = vadd.f32 0.0, %v678
  %v680 = vpop.f32.mrb[0].mxu0
  %v681 = vadd.f32 0.0, %v680
  %682 = vdwg.mxu0
  %v683 = vadd.f32 %v246, %v679
  %v684 = vadd.f32 %v248, %v681
  %v685 = vxor.u32 %v683, 2147483648
  %v686 = vxor.u32 %v684, 2147483648
  %v687 = vmul.f32 %v685, 1.442695
  %v688 = vpow.pop %v687
  %v689 = vmul.f32 %v686, 1.442695
  %v690 = vpow.pop %v689
  %v691 = vadd.f32 %v688, 1.0
  %v692 = vadd.f32 %v690, 1.0
  %v693 = vrcp.pop %v691
  %v694 = vmul.f32 1.0, %v693
  %v695 = vrcp.pop %v692
  %v696 = vmul.f32 1.0, %v695
  %v697 = vtanh.pop %v684
  %v698 = vmul.f32 %v694, %v602
  %700 = vrot.lane.b32.xlu0 %v697, 64
  %v701 = vpop.permute.xlu0 %700
  %v703 = vmul.f32 %v694, %v701
  %705 = vrot.lane.b32.xlu0 %v703, 64
  %v706 = vpop.permute.xlu0 %705
  %v708 = vadd.f32 %v698, %v706
  %v709 = vtanh.pop %v708
  %711 = vrot.lane.b32.xlu0 %v709, 64
  %v712 = vpop.permute.xlu0 %711
  %v714 = vmul.f32 %v696, %v712
  %v716 = vsel %vm290, %v714, 0
  %718 = vmatprep.subr.mxu0 %v275
  %719 = vmatpush1.msra.mxu0 %v274
  %720 = vmatprep.subr.mxu0 %v277
  %721 = vmatpush1.msra.mxu0 %v276
  %722 = vmatprep.subr.mxu0 %v279
  %723 = vmatpush1.msra.mxu0 %v278
  %724 = vmatprep.subr.mxu0 %v281
  %725 = vmatpush1.msra.mxu0 %v280
  %726 = vmatprep.subr.mxu0 %v283
  %727 = vmatpush1.msra.mxu0 %v282
  %728 = vmatprep.subr.mxu0 %v285
  %729 = vmatpush1.msra.mxu0 %v284
  %730 = vmatprep.subr.mxu0 %v287
  %731 = vmatpush1.msra.mxu0 %v286
  %732 = vmatprep.subr.mxu0 %v289
  %733 = vmatpush1.msra.mxu0 %v288
  %734 = vmatprep.subr.mxu0 0.0
  %735 = vmatpush1.msra.mxu0 0.0
  %736 = vmatprep.subr.mxu0 0.0
  %737 = vmatpush1.msra.mxu0 0.0
  %738 = vmatprep.subr.mxu0 0.0
  %739 = vmatpush1.msra.mxu0 0.0
  %740 = vmatprep.subr.mxu0 0.0
  %741 = vmatpush1.msra.mxu0 0.0
  %742 = vmatprep.subr.mxu0 0.0
  %743 = vmatpush1.msra.mxu0 0.0
  %744 = vmatprep.subr.mxu0 0.0
  %745 = vmatpush1.msra.mxu0 0.0
  %746 = vmatprep.subr.mxu0 0.0
  %747 = vmatpush1.msra.mxu0 0.0
  %748 = vmatprep.subr.mxu0 0.0
  %749 = vmatpush1.msra.mxu0 0.0
  %750 = vmatprep.subr.mxu0 0.0
  %751 = vmatpush1.msra.mxu0 0.0
  %752 = vmatprep.subr.mxu0 0.0
  %753 = vmatpush1.msra.mxu0 0.0
  %754 = vmatprep.subr.mxu0 0.0
  %755 = vmatpush1.msra.mxu0 0.0
  %756 = vmatprep.subr.mxu0 0.0
  %757 = vmatpush1.msra.mxu0 0.0
  %758 = vmatprep.subr.mxu0 0.0
  %759 = vmatpush1.msra.mxu0 0.0
  %760 = vmatprep.subr.mxu0 0.0
  %761 = vmatpush1.msra.mxu0 0.0
  %762 = vmatprep.subr.mxu0 0.0
  %763 = vmatpush1.msra.mxu0 0.0
  %764 = vmatprep.subr.mxu0 0.0
  %765 = vmatpush1.msra.mxu0 0.0
  %766 = vmatprep.subr.mxu0 0.0
  %767 = vmatpush1.msra.mxu0 0.0
  %768 = vmatprep.subr.mxu0 0.0
  %769 = vmatpush1.msra.mxu0 0.0
  %770 = vmatprep.subr.mxu0 0.0
  %771 = vmatpush1.msra.mxu0 0.0
  %772 = vmatprep.subr.mxu0 0.0
  %773 = vmatpush1.msra.mxu0 0.0
  %774 = vmatprep.subr.mxu0 0.0
  %775 = vmatpush1.msra.mxu0 0.0
  %776 = vmatprep.subr.mxu0 0.0
  %777 = vmatpush1.msra.mxu0 0.0
  %778 = vmatprep.subr.mxu0 0.0
  %779 = vmatpush1.msra.mxu0 0.0
  %780 = vmatprep.subr.mxu0 0.0
  %781 = vmatpush1.msra.mxu0 0.0
  %782 = vmatprep.mubr.f32.mxu0 0.0
  %783 = vmatmul.mubr.f32.gmra.mrb[0].mxu0 %v716
  %v784 = vpop.f32.mrb[0].mxu0
  %v785 = vadd.f32 0.0, %v784
  %v786 = vpop.f32.mrb[0].mxu0
  %v787 = vadd.f32 0.0, %v786
  %788 = vdwg.mxu0
  %v789 = vadd.f32 %v252, %v785
  %v790 = vadd.f32 %v254, %v787
  %v791 = vxor.u32 %v789, 2147483648
  %v792 = vxor.u32 %v790, 2147483648
  %v793 = vmul.f32 %v791, 1.442695
  %v794 = vpow.pop %v793
  %v795 = vmul.f32 %v792, 1.442695
  %v796 = vpow.pop %v795
  %v797 = vadd.f32 %v794, 1.0
  %v798 = vadd.f32 %v796, 1.0
  %v799 = vrcp.pop %v797
  %v800 = vmul.f32 1.0, %v799
  %v801 = vrcp.pop %v798
  %v802 = vmul.f32 1.0, %v801
  %v803 = vtanh.pop %v790
  %v804 = vmul.f32 %v800, %v708
  %806 = vrot.lane.b32.xlu0 %v803, 64
  %v807 = vpop.permute.xlu0 %806
  %v809 = vmul.f32 %v800, %v807
  %811 = vrot.lane.b32.xlu0 %v809, 64
  %v812 = vpop.permute.xlu0 %811
  %v814 = vadd.f32 %v804, %v812
  %v815 = vtanh.pop %v814
  %817 = vrot.lane.b32.xlu0 %v815, 64
  %v818 = vpop.permute.xlu0 %817
  %v820 = vmul.f32 %v802, %v818
  %v822 = vsel %vm290, %v820, 0
  %824 = vmatprep.subr.mxu0 %v275
  %825 = vmatpush1.msra.mxu0 %v274
  %826 = vmatprep.subr.mxu0 %v277
  %827 = vmatpush1.msra.mxu0 %v276
  %828 = vmatprep.subr.mxu0 %v279
  %829 = vmatpush1.msra.mxu0 %v278
  %830 = vmatprep.subr.mxu0 %v281
  %831 = vmatpush1.msra.mxu0 %v280
  %832 = vmatprep.subr.mxu0 %v283
  %833 = vmatpush1.msra.mxu0 %v282
  %834 = vmatprep.subr.mxu0 %v285
  %835 = vmatpush1.msra.mxu0 %v284
  %836 = vmatprep.subr.mxu0 %v287
  %837 = vmatpush1.msra.mxu0 %v286
  %838 = vmatprep.subr.mxu0 %v289
  %839 = vmatpush1.msra.mxu0 %v288
  %840 = vmatprep.subr.mxu0 0.0
  %841 = vmatpush1.msra.mxu0 0.0
  %842 = vmatprep.subr.mxu0 0.0
  %843 = vmatpush1.msra.mxu0 0.0
  %844 = vmatprep.subr.mxu0 0.0
  %845 = vmatpush1.msra.mxu0 0.0
  %846 = vmatprep.subr.mxu0 0.0
  %847 = vmatpush1.msra.mxu0 0.0
  %848 = vmatprep.subr.mxu0 0.0
  %849 = vmatpush1.msra.mxu0 0.0
  %850 = vmatprep.subr.mxu0 0.0
  %851 = vmatpush1.msra.mxu0 0.0
  %852 = vmatprep.subr.mxu0 0.0
  %853 = vmatpush1.msra.mxu0 0.0
  %854 = vmatprep.subr.mxu0 0.0
  %855 = vmatpush1.msra.mxu0 0.0
  %856 = vmatprep.subr.mxu0 0.0
  %857 = vmatpush1.msra.mxu0 0.0
  %858 = vmatprep.subr.mxu0 0.0
  %859 = vmatpush1.msra.mxu0 0.0
  %860 = vmatprep.subr.mxu0 0.0
  %861 = vmatpush1.msra.mxu0 0.0
  %862 = vmatprep.subr.mxu0 0.0
  %863 = vmatpush1.msra.mxu0 0.0
  %864 = vmatprep.subr.mxu0 0.0
  %865 = vmatpush1.msra.mxu0 0.0
  %866 = vmatprep.subr.mxu0 0.0
  %867 = vmatpush1.msra.mxu0 0.0
  %868 = vmatprep.subr.mxu0 0.0
  %869 = vmatpush1.msra.mxu0 0.0
  %870 = vmatprep.subr.mxu0 0.0
  %871 = vmatpush1.msra.mxu0 0.0
  %872 = vmatprep.subr.mxu0 0.0
  %873 = vmatpush1.msra.mxu0 0.0
  %874 = vmatprep.subr.mxu0 0.0
  %875 = vmatpush1.msra.mxu0 0.0
  %876 = vmatprep.subr.mxu0 0.0
  %877 = vmatpush1.msra.mxu0 0.0
  %878 = vmatprep.subr.mxu0 0.0
  %879 = vmatpush1.msra.mxu0 0.0
  %880 = vmatprep.subr.mxu0 0.0
  %881 = vmatpush1.msra.mxu0 0.0
  %882 = vmatprep.subr.mxu0 0.0
  %883 = vmatpush1.msra.mxu0 0.0
  %884 = vmatprep.subr.mxu0 0.0
  %885 = vmatpush1.msra.mxu0 0.0
  %886 = vmatprep.subr.mxu0 0.0
  %887 = vmatpush1.msra.mxu0 0.0
  %888 = vmatprep.mubr.f32.mxu0 0.0
  %889 = vmatmul.mubr.f32.gmra.mrb[0].mxu0 %v822
  %v890 = vpop.f32.mrb[0].mxu0
  %v891 = vadd.f32 0.0, %v890
  %v892 = vpop.f32.mrb[0].mxu0
  %v893 = vadd.f32 0.0, %v892
  %894 = vdwg.mxu0
  %v895 = vadd.f32 %v258, %v891
  %v896 = vadd.f32 %v260, %v893
  %v897 = vxor.u32 %v895, 2147483648
  %v898 = vxor.u32 %v896, 2147483648
  %v899 = vmul.f32 %v897, 1.442695
  %v900 = vpow.pop %v899
  %v901 = vmul.f32 %v898, 1.442695
  %v902 = vpow.pop %v901
  %v903 = vadd.f32 %v900, 1.0
  %v904 = vadd.f32 %v902, 1.0
  %v905 = vrcp.pop %v903
  %v906 = vmul.f32 1.0, %v905
  %v907 = vrcp.pop %v904
  %v908 = vmul.f32 1.0, %v907
  %v909 = vtanh.pop %v896
  %v910 = vmul.f32 %v906, %v814
  %912 = vrot.lane.b32.xlu0 %v909, 64
  %v913 = vpop.permute.xlu0 %912
  %v915 = vmul.f32 %v906, %v913
  %917 = vrot.lane.b32.xlu0 %v915, 64
  %v918 = vpop.permute.xlu0 %917
  %v920 = vadd.f32 %v910, %v918
  %v921 = vtanh.pop %v920
  %923 = vrot.lane.b32.xlu0 %v921, 64
  %v924 = vpop.permute.xlu0 %923
  %v926 = vmul.f32 %v908, %v924
  %v928 = vsel %vm290, %v926, 0
  %930 = vmatprep.subr.mxu0 %v275
  %931 = vmatpush1.msra.mxu0 %v274
  %932 = vmatprep.subr.mxu0 %v277
  %933 = vmatpush1.msra.mxu0 %v276
  %934 = vmatprep.subr.mxu0 %v279
  %935 = vmatpush1.msra.mxu0 %v278
  %936 = vmatprep.subr.mxu0 %v281
  %937 = vmatpush1.msra.mxu0 %v280
  %938 = vmatprep.subr.mxu0 %v283
  %939 = vmatpush1.msra.mxu0 %v282
  %940 = vmatprep.subr.mxu0 %v285
  %941 = vmatpush1.msra.mxu0 %v284
  %942 = vmatprep.subr.mxu0 %v287
  %943 = vmatpush1.msra.mxu0 %v286
  %944 = vmatprep.subr.mxu0 %v289
  %945 = vmatpush1.msra.mxu0 %v288
  %946 = vmatprep.subr.mxu0 0.0
  %947 = vmatpush1.msra.mxu0 0.0
  %948 = vmatprep.subr.mxu0 0.0
  %949 = vmatpush1.msra.mxu0 0.0
  %950 = vmatprep.subr.mxu0 0.0
  %951 = vmatpush1.msra.mxu0 0.0
  %952 = vmatprep.subr.mxu0 0.0
  %953 = vmatpush1.msra.mxu0 0.0
  %954 = vmatprep.subr.mxu0 0.0
  %955 = vmatpush1.msra.mxu0 0.0
  %956 = vmatprep.subr.mxu0 0.0
  %957 = vmatpush1.msra.mxu0 0.0
  %958 = vmatprep.subr.mxu0 0.0
  %959 = vmatpush1.msra.mxu0 0.0
  %960 = vmatprep.subr.mxu0 0.0
  %961 = vmatpush1.msra.mxu0 0.0
  %962 = vmatprep.subr.mxu0 0.0
  %963 = vmatpush1.msra.mxu0 0.0
  %964 = vmatprep.subr.mxu0 0.0
  %965 = vmatpush1.msra.mxu0 0.0
  %966 = vmatprep.subr.mxu0 0.0
  %967 = vmatpush1.msra.mxu0 0.0
  %968 = vmatprep.subr.mxu0 0.0
  %969 = vmatpush1.msra.mxu0 0.0
  %970 = vmatprep.subr.mxu0 0.0
  %971 = vmatpush1.msra.mxu0 0.0
  %972 = vmatprep.subr.mxu0 0.0
  %973 = vmatpush1.msra.mxu0 0.0
  %974 = vmatprep.subr.mxu0 0.0
  %975 = vmatpush1.msra.mxu0 0.0
  %976 = vmatprep.subr.mxu0 0.0
  %977 = vmatpush1.msra.mxu0 0.0
  %978 = vmatprep.subr.mxu0 0.0
  %979 = vmatpush1.msra.mxu0 0.0
  %980 = vmatprep.subr.mxu0 0.0
  %981 = vmatpush1.msra.mxu0 0.0
  %982 = vmatprep.subr.mxu0 0.0
  %983 = vmatpush1.msra.mxu0 0.0
  %984 = vmatprep.subr.mxu0 0.0
  %985 = vmatpush1.msra.mxu0 0.0
  %986 = vmatprep.subr.mxu0 0.0
  %987 = vmatpush1.msra.mxu0 0.0
  %988 = vmatprep.subr.mxu0 0.0
  %989 = vmatpush1.msra.mxu0 0.0
  %990 = vmatprep.subr.mxu0 0.0
  %991 = vmatpush1.msra.mxu0 0.0
  %992 = vmatprep.subr.mxu0 0.0
  %993 = vmatpush1.msra.mxu0 0.0
  %994 = vmatprep.mubr.f32.mxu0 0.0
  %995 = vmatmul.mubr.f32.gmra.mrb[0].mxu0 %v928
  %v996 = vpop.f32.mrb[0].mxu0
  %v997 = vadd.f32 0.0, %v996
  %v998 = vpop.f32.mrb[0].mxu0
  %v999 = vadd.f32 0.0, %v998
  %1000 = vdwg.mxu0
  %v1001 = vadd.f32 %v264, %v997
  %v1002 = vadd.f32 %v266, %v999
  %v1003 = vxor.u32 %v1001, 2147483648
  %v1004 = vxor.u32 %v1002, 2147483648
  %v1005 = vmul.f32 %v1003, 1.442695
  %v1006 = vpow.pop %v1005
  %v1007 = vmul.f32 %v1004, 1.442695
  %v1008 = vpow.pop %v1007
  %v1009 = vadd.f32 %v1006, 1.0
  %v1010 = vadd.f32 %v1008, 1.0
  %v1011 = vrcp.pop %v1009
  %v1012 = vmul.f32 1.0, %v1011
  %v1013 = vrcp.pop %v1010
  %v1014 = vmul.f32 1.0, %v1013
  %v1015 = vtanh.pop %v1002
  %v1016 = vmul.f32 %v1012, %v920
  %1018 = vrot.lane.b32.xlu0 %v1015, 64
  %v1019 = vpop.permute.xlu0 %1018
  %v1021 = vmul.f32 %v1012, %v1019
  %1023 = vrot.lane.b32.xlu0 %v1021, 64
  %v1024 = vpop.permute.xlu0 %1023
  %v1026 = vadd.f32 %v1016, %v1024
  %v1027 = vtanh.pop %v1026
  %1029 = vrot.lane.b32.xlu0 %v1027, 64
  %v1030 = vpop.permute.xlu0 %1029
  %v1032 = vmul.f32 %v1014, %v1030
  %v1034 = vsel %vm290, %v1032, 0
  %1036 = vmatprep.subr.mxu0 %v275
  %1037 = vmatpush1.msra.mxu0 %v274
  %1038 = vmatprep.subr.mxu0 %v277
  %1039 = vmatpush1.msra.mxu0 %v276
  %1040 = vmatprep.subr.mxu0 %v279
  %1041 = vmatpush1.msra.mxu0 %v278
  %1042 = vmatprep.subr.mxu0 %v281
  %1043 = vmatpush1.msra.mxu0 %v280
  %1044 = vmatprep.subr.mxu0 %v283
  %1045 = vmatpush1.msra.mxu0 %v282
  %1046 = vmatprep.subr.mxu0 %v285
  %1047 = vmatpush1.msra.mxu0 %v284
  %1048 = vmatprep.subr.mxu0 %v287
  %1049 = vmatpush1.msra.mxu0 %v286
  %1050 = vmatprep.subr.mxu0 %v289
  %1051 = vmatpush1.msra.mxu0 %v288
  %1052 = vmatprep.subr.mxu0 0.0
  %1053 = vmatpush1.msra.mxu0 0.0
  %1054 = vmatprep.subr.mxu0 0.0
  %1055 = vmatpush1.msra.mxu0 0.0
  %1056 = vmatprep.subr.mxu0 0.0
  %1057 = vmatpush1.msra.mxu0 0.0
  %1058 = vmatprep.subr.mxu0 0.0
  %1059 = vmatpush1.msra.mxu0 0.0
  %1060 = vmatprep.subr.mxu0 0.0
  %1061 = vmatpush1.msra.mxu0 0.0
  %1062 = vmatprep.subr.mxu0 0.0
  %1063 = vmatpush1.msra.mxu0 0.0
  %1064 = vmatprep.subr.mxu0 0.0
  %1065 = vmatpush1.msra.mxu0 0.0
  %1066 = vmatprep.subr.mxu0 0.0
  %1067 = vmatpush1.msra.mxu0 0.0
  %1068 = vmatprep.subr.mxu0 0.0
  %1069 = vmatpush1.msra.mxu0 0.0
  %1070 = vmatprep.subr.mxu0 0.0
  %1071 = vmatpush1.msra.mxu0 0.0
  %1072 = vmatprep.subr.mxu0 0.0
  %1073 = vmatpush1.msra.mxu0 0.0
  %1074 = vmatprep.subr.mxu0 0.0
  %1075 = vmatpush1.msra.mxu0 0.0
  %1076 = vmatprep.subr.mxu0 0.0
  %1077 = vmatpush1.msra.mxu0 0.0
  %1078 = vmatprep.subr.mxu0 0.0
  %1079 = vmatpush1.msra.mxu0 0.0
  %1080 = vmatprep.subr.mxu0 0.0
  %1081 = vmatpush1.msra.mxu0 0.0
  %1082 = vmatprep.subr.mxu0 0.0
  %1083 = vmatpush1.msra.mxu0 0.0
  %1084 = vmatprep.subr.mxu0 0.0
  %1085 = vmatpush1.msra.mxu0 0.0
  %1086 = vmatprep.subr.mxu0 0.0
  %1087 = vmatpush1.msra.mxu0 0.0
  %1088 = vmatprep.subr.mxu0 0.0
  %1089 = vmatpush1.msra.mxu0 0.0
  %1090 = vmatprep.subr.mxu0 0.0
  %1091 = vmatpush1.msra.mxu0 0.0
  %1092 = vmatprep.subr.mxu0 0.0
  %1093 = vmatpush1.msra.mxu0 0.0
  %1094 = vmatprep.subr.mxu0 0.0
  %1095 = vmatpush1.msra.mxu0 0.0
  %1096 = vmatprep.subr.mxu0 0.0
  %1097 = vmatpush1.msra.mxu0 0.0
  %1098 = vmatprep.subr.mxu0 0.0
  %1099 = vmatpush1.msra.mxu0 0.0
  %1100 = vmatprep.mubr.f32.mxu0 0.0
  %1101 = vmatmul.mubr.f32.gmra.mrb[0].mxu0 %v1034
  %v1102 = vpop.f32.mrb[0].mxu0
  %v1103 = vadd.f32 0.0, %v1102
  %v1104 = vpop.f32.mrb[0].mxu0
  %v1105 = vadd.f32 0.0, %v1104
  %1106 = vdwg.mxu0
  %v1107 = vadd.f32 %v270, %v1103
  %v1108 = vadd.f32 %v272, %v1105
  %v1109 = vxor.u32 %v1107, 2147483648
  %v1110 = vxor.u32 %v1108, 2147483648
  %v1111 = vmul.f32 %v1109, 1.442695
  %v1112 = vpow.pop %v1111
  %v1113 = vmul.f32 %v1110, 1.442695
  %v1114 = vpow.pop %v1113
  %v1115 = vadd.f32 %v1112, 1.0
  %v1116 = vadd.f32 %v1114, 1.0
  %v1117 = vrcp.pop %v1115
  %v1118 = vmul.f32 1.0, %v1117
  %v1119 = vrcp.pop %v1116
  %v1120 = vmul.f32 1.0, %v1119
  %v1121 = vtanh.pop %v1108
  %v1122 = vmul.f32 %v1118, %v1026
  %1124 = vrot.lane.b32.xlu0 %v1121, 64
  %v1125 = vpop.permute.xlu0 %1124
  %v1127 = vmul.f32 %v1118, %v1125
  %1129 = vrot.lane.b32.xlu0 %v1127, 64
  %v1130 = vpop.permute.xlu0 %1129
  %v1132 = vadd.f32 %v1122, %v1130
  %v1133 = vtanh.pop %v1132
  %1135 = vrot.lane.b32.xlu0 %v1133, 64
  %v1136 = vpop.permute.xlu0 %1135
  %v1138 = vmul.f32 %v1120, %v1136
  %v1139 = vld [vmem:[%s6] sm:$0xff]
  %v1140 = vld [vmem:[%s6 + $0x8] sm:$0xff]
  %v1141 = vld [vmem:[%s6 + $0x10] sm:$0xff]
  %v1142 = vld [vmem:[%s6 + $0x18] sm:$0xff]
  %v1143 = vld [vmem:[%s6 + $0x20] sm:$0xff]
  %v1144 = vld [vmem:[%s6 + $0x28] sm:$0xff]
  %v1145 = vld [vmem:[%s6 + $0x30] sm:$0xff]
  %v1146 = vld [vmem:[%s6 + $0x38] sm:$0xff]
  %s1147 = sld [smem:[#allocation2]]
  %v1148 = vstv %s1147
  %v1150 = vsel %vm290, %v1138, 0
  %1152 = vmatprep.subr.mxu0 0.0
  %1153 = vmatpush1.msra.mxu0 %v1139
  %1154 = vmatprep.subr.mxu0 0.0
  %1155 = vmatpush1.msra.mxu0 %v1140
  %1156 = vmatprep.subr.mxu0 0.0
  %1157 = vmatpush1.msra.mxu0 %v1141
  %1158 = vmatprep.subr.mxu0 0.0
  %1159 = vmatpush1.msra.mxu0 %v1142
  %1160 = vmatprep.subr.mxu0 0.0
  %1161 = vmatpush1.msra.mxu0 %v1143
  %1162 = vmatprep.subr.mxu0 0.0
  %1163 = vmatpush1.msra.mxu0 %v1144
  %1164 = vmatprep.subr.mxu0 0.0
  %1165 = vmatpush1.msra.mxu0 %v1145
  %1166 = vmatprep.subr.mxu0 0.0
  %1167 = vmatpush1.msra.mxu0 %v1146
  %1168 = vmatprep.subr.mxu0 0.0
  %1169 = vmatpush1.msra.mxu0 0.0
  %1170 = vmatprep.subr.mxu0 0.0
  %1171 = vmatpush1.msra.mxu0 0.0
  %1172 = vmatprep.subr.mxu0 0.0
  %1173 = vmatpush1.msra.mxu0 0.0
  %1174 = vmatprep.subr.mxu0 0.0
  %1175 = vmatpush1.msra.mxu0 0.0
  %1176 = vmatprep.subr.mxu0 0.0
  %1177 = vmatpush1.msra.mxu0 0.0
  %1178 = vmatprep.subr.mxu0 0.0
  %1179 = vmatpush1.msra.mxu0 0.0
  %1180 = vmatprep.subr.mxu0 0.0
  %1181 = vmatpush1.msra.mxu0 0.0
  %1182 = vmatprep.subr.mxu0 0.0
  %1183 = vmatpush1.msra.mxu0 0.0
  %1184 = vmatprep.subr.mxu0 0.0
  %1185 = vmatpush1.msra.mxu0 0.0
  %1186 = vmatprep.subr.mxu0 0.0
  %1187 = vmatpush1.msra.mxu0 0.0
  %1188 = vmatprep.subr.mxu0 0.0
  %1189 = vmatpush1.msra.mxu0 0.0
  %1190 = vmatprep.subr.mxu0 0.0
  %1191 = vmatpush1.msra.mxu0 0.0
  %1192 = vmatprep.subr.mxu0 0.0
  %1193 = vmatpush1.msra.mxu0 0.0
  %1194 = vmatprep.subr.mxu0 0.0
  %1195 = vmatpush1.msra.mxu0 0.0
  %1196 = vmatprep.subr.mxu0 0.0
  %1197 = vmatpush1.msra.mxu0 0.0
  %1198 = vmatprep.subr.mxu0 0.0
  %1199 = vmatpush1.msra.mxu0 0.0
  %1200 = vmatprep.subr.mxu0 0.0
  %1201 = vmatpush1.msra.mxu0 0.0
  %1202 = vmatprep.subr.mxu0 0.0
  %1203 = vmatpush1.msra.mxu0 0.0
  %1204 = vmatprep.subr.mxu0 0.0
  %1205 = vmatpush1.msra.mxu0 0.0
  %1206 = vmatprep.subr.mxu0 0.0
  %1207 = vmatpush1.msra.mxu0 0.0
  %1208 = vmatprep.subr.mxu0 0.0
  %1209 = vmatpush1.msra.mxu0 0.0
  %1210 = vmatprep.subr.mxu0 0.0
  %1211 = vmatpush1.msra.mxu0 0.0
  %1212 = vmatprep.subr.mxu0 0.0
  %1213 = vmatpush1.msra.mxu0 0.0
  %1214 = vmatprep.subr.mxu0 0.0
  %1215 = vmatpush1.msra.mxu0 0.0
  %1216 = vmatprep.mubr.f32.mxu0 0.0
  %1217 = vmatmul.mubr.f32.gmra.mrb[0].mxu0 %v1150
  %v1218 = vpop.f32.mrb[0].mxu0
  %v1219 = vadd.f32 %v1148, %v1218
  %v1220 = vpop.f32.mrb[0].mxu0
  %1221 = vdwg.mxu0
  %vm1222 = vcmask 7168
  %1223 = vst.msk [vmem:[%s8] sm:$0xff] %vm1222, %v1219
  // Predicated region
  $region34: #{tpu_custom_call.1} parent=0 // pred_check
    _
  $region35: #{tpu_custom_call.1} parent=0 // pred_check_branch
    %1225 = sbr.rel (0) target = $region37
  $region36: #{tpu_custom_call.1} parent=0 // pred_region
    _
  $region37: #{tpu_custom_call.1} parent=0 // pred_fallthru
    _
  // Predicated region
  $region38: #{tpu_custom_call.1} parent=0 // pred_check
    _
  $region39: #{tpu_custom_call.1} parent=0 // pred_check_branch
    %1227 = sbr.rel (0) target = $region41
  $region40: #{tpu_custom_call.1} parent=0 // pred_region
    _
  $region41: #{tpu_custom_call.1} parent=0 // pred_fallthru
    _

</llo_original>
